<compile_context>
chip_gen: v6e
topology: v6e:2x2x1
jax: 0.10.0
libtpu: 0.0.40
codegen_flags: <defaults>
</compile_context>

<pallas_src>
import functools
import math

import jax
import jax.numpy as jnp
from jax.experimental import pallas as pl
from jax.experimental.pallas import tpu as pltpu

_SQRT_2_OVER_PI = math.sqrt(2.0 / math.pi)
# 0.5 * x * (1 + tanh(c * (x + 0.044715 x^3)))  ==  x * sigmoid(a*x + b*x^3)
_A = 2.0 * _SQRT_2_OVER_PI               # a = 2c
_B = 2.0 * _SQRT_2_OVER_PI * 0.044715    # b = 2c * 0.044715


def gelu_kernel(x_ref, o_ref, *, compute_dtype):
    # x_ref / o_ref: (TM, C) tiles. Compute in compute_dtype, cast back on store.
    x = x_ref[...].astype(compute_dtype)
    a = jnp.asarray(_A, compute_dtype)
    b = jnp.asarray(_B, compute_dtype)
    z = a * x + b * (x * x * x)
    o_ref[...] = (x * jax.nn.sigmoid(z)).astype(o_ref.dtype)


def gelu(x, *, block_bytes=4 * 1024 * 1024, lane_width=512):
    """Elementwise tanh-approx GELU on an arbitrarily shaped array (Pallas TPU)."""
    orig_shape = x.shape
    n = x.size
    if n == 0:
        return x

    dtype = x.dtype
    itemsize = jnp.dtype(dtype).itemsize
    # Minimum sublane multiple per dtype: 8 (f32), 16 (bf16/f16), 32 (int8/fp8).
    sublane = max(8, 32 // itemsize)
    # Native bf16 math on bf16 inputs (v6e/v7x have bf16 VPU/EUP; still correct on
    # v5e, just upcast by the compiler). Everything else computes in f32.
    compute_dtype = jnp.bfloat16 if dtype == jnp.bfloat16 else jnp.float32

    flat = x.reshape(-1)

    if n % 128 == 0:
        # Zero-copy path: widest lane count (<= lane_width) that divides n exactly,
        # so the reshape to (rows, C) is a free bitcast; nothing is padded or sliced.
        C = 128 * math.gcd(n // 128, lane_width // 128)
        rows = n // C
        needs_pad = False
    else:
        # TODO(synk): rare fallback (element count not a multiple of 128) still pays
        # one extra HBM read+write for the pad/slice copies; real GELU activations
        # always have a 128-divisible size so this path should not trigger.
        C = lane_width
        rows = pl.cdiv(n, C)
        needs_pad = True
        flat = jnp.pad(flat, (0, rows * C - n))  # gelu(0) == 0; tail is discarded

    x2d = flat.reshape(rows, C)

    # ~block_bytes per input block (output block is the same size); with default
    # double buffering the VMEM footprint is ~4 * block_bytes.
    budget_rows = max(sublane, ((block_bytes // itemsize) // C) // sublane * sublane)
    if rows <= budget_rows:
        tm = rows          # single row-block; a full-dim block is always legal
    else:
        tm = budget_rows   # multiple of the sublane tile; last block is masked
    grid = (pl.cdiv(rows, tm),)

    # Double-buffered in+out footprint plus headroom; >= 32 MiB so it also clears
    # v5e's 16 MiB default scoped limit, capped below v7x's 64 MiB physical VMEM.
    needed = 4 * tm * C * itemsize
    vmem_limit = min(max(2 * needed, 32 * 1024 * 1024), 64 * 1024 * 1024)

    out2d = pl.pallas_call(
        functools.partial(gelu_kernel, compute_dtype=compute_dtype),
        out_shape=jax.ShapeDtypeStruct((rows, C), dtype),
        grid_spec=pltpu.PrefetchScalarGridSpec(
            num_scalar_prefetch=0,
            grid=grid,
            in_specs=[pl.BlockSpec((tm, C), lambda i: (i, 0))],
            out_specs=pl.BlockSpec((tm, C), lambda i: (i, 0)),
        ),
        compiler_params=pltpu.CompilerParams(
            # Independent row-tiles. On v7x, consider pltpu.CORE_PARALLEL or an
            # explicit pl.core_map split if one TC alone cannot saturate HBM.
            dimension_semantics=("parallel",),
            vmem_limit_bytes=vmem_limit,
        ),
        cost_estimate=pl.CostEstimate(
            flops=6 * rows * C,
            transcendentals=rows * C,
            bytes_accessed=2 * rows * C * itemsize,
        ),
    )(x2d)

    out = out2d.reshape(-1)
    if needs_pad:
        out = out[:n]
    return out.reshape(orig_shape)


def gelu_ref(x):
    # Exact reproduction of the PyTorch module's formula, in f32.
    xf = x.astype(jnp.float32)
    c = jnp.float32(_SQRT_2_OVER_PI)
    out = 0.5 * xf * (1.0 + jnp.tanh(c * (xf + 0.044715 * (xf * xf * xf))))
    return out.astype(x.dtype)


if __name__ == "__main__":
    key = jax.random.PRNGKey(0)
    k1, k2, k3, k4, k5 = jax.random.split(key, 5)

    # Small shape consistent with the module's usage (batch, seq, emb_dim).
    batch, seq, emb_dim = 2, 8, 32
    x_small = jax.random.normal(k1, (batch, seq, emb_dim), jnp.float32)
    out_small = jax.block_until_ready(gelu(x_small))
    assert out_small.shape == (batch, seq, emb_dim)
    assert jnp.allclose(out_small, gelu_ref(x_small), atol=1e-5, rtol=1e-5)

    # Larger shape: multi-step pipelined grid, zero-copy path (size % 128 == 0).
    x_big = jax.random.normal(k2, (2, 128, 2048), jnp.float32)
    out_big = jax.block_until_ready(gelu(x_big))
    assert out_big.shape == x_big.shape
    assert jnp.allclose(out_big, gelu_ref(x_big), atol=1e-5, rtol=1e-5)

    # Shape whose row count is not a multiple of the row tile: exercises the
    # masked partial last block (still zero-copy, no pad/slice).
    x_odd_rows = jax.random.normal(k3, (5, 1000, 512), jnp.float32)
    out_odd_rows = jax.block_until_ready(gelu(x_odd_rows))
    assert out_odd_rows.shape == x_odd_rows.shape
    assert jnp.allclose(out_odd_rows, gelu_ref(x_odd_rows), atol=1e-5, rtol=1e-5)

    # Odd element count: exercises the (rare) pad fallback path.
    x_tail = jax.random.normal(k4, (3, 7, 5), jnp.float32)
    out_tail = jax.block_until_ready(gelu(x_tail))
    assert out_tail.shape == x_tail.shape
    assert jnp.allclose(out_tail, gelu_ref(x_tail), atol=1e-5, rtol=1e-5)

    # bf16 input: native bf16 compute path.
    x_bf16 = jax.random.normal(k5, (2, 128, 256), jnp.bfloat16)
    out_bf16 = jax.block_until_ready(gelu(x_bf16))
    assert out_bf16.shape == x_bf16.shape
    assert out_bf16.dtype == jnp.bfloat16
    assert jnp.allclose(out_bf16.astype(jnp.float32),
                        gelu_ref(x_bf16).astype(jnp.float32),
                        atol=5e-2, rtol=5e-2)

    print("KERNEL_OK")
</pallas_src>

<mosaic_0001>
module attributes {stable_mosaic.version = 11 : i64} {
  func.func @gelu_kernel(%arg0: i32, %arg1: memref<1x512xf32, #tpu.memory_space<vmem>>, %arg2: memref<1x512xf32, #tpu.memory_space<vmem>>) attributes {dimension_semantics = [#tpu.dimension_semantics<parallel>], iteration_bounds = array<i64: 1>, scalar_prefetch = 0 : i64, scratch_operands = 0 : i64, tpu.core_type = #tpu.core_type<tc>, window_params = [{transform_indices = @transform_0, window_bounds = array<i64: 1, 512>}, {transform_indices = @transform_1, window_bounds = array<i64: 1, 512>}]} {
    %c0 = arith.constant 0 : index
    %c0_0 = arith.constant 0 : index
    %0 = vector.load %arg1[%c0, %c0_0] : memref<1x512xf32, #tpu.memory_space<vmem>>, vector<1x512xf32>
    %cst = arith.constant 1.59576917 : f32
    %1 = vector.broadcast %cst : f32 to vector<1x512xf32>
    %2 = arith.mulf %1, %0 : vector<1x512xf32>
    %3 = arith.mulf %0, %0 : vector<1x512xf32>
    %4 = arith.mulf %3, %0 : vector<1x512xf32>
    %cst_1 = arith.constant 0.0713548139 : f32
    %5 = vector.broadcast %cst_1 : f32 to vector<1x512xf32>
    %6 = arith.mulf %5, %4 : vector<1x512xf32>
    %7 = arith.addf %2, %6 : vector<1x512xf32>
    %8 = arith.negf %7 : vector<1x512xf32>
    %9 = math.exp %8 : vector<1x512xf32>
    %cst_2 = arith.constant 1.000000e+00 : f32
    %10 = vector.broadcast %cst_2 : f32 to vector<1x512xf32>
    %11 = arith.addf %10, %9 : vector<1x512xf32>
    %12 = arith.divf %10, %11 : vector<1x512xf32>
    %13 = arith.mulf %0, %12 : vector<1x512xf32>
    %c0_3 = arith.constant 0 : index
    %c0_4 = arith.constant 0 : index
    %14 = vector.load %arg2[%c0_3, %c0_4] : memref<1x512xf32, #tpu.memory_space<vmem>>, vector<1x512xf32>
    tpu.vector_store %arg2[%c0_3, %c0_4], %13 {strides = array<i32>} : memref<1x512xf32, #tpu.memory_space<vmem>>, vector<1x512xf32>,
    return
  }
  func.func @transform_0(%arg0: i32) -> (i32, i32) {
    %c0_i32 = arith.constant 0 : i32
    %c0_i32_0 = arith.constant 0 : i32
    return %arg0, %c0_i32 : i32, i32
  }
  func.func @transform_1(%arg0: i32) -> (i32, i32) {
    %c0_i32 = arith.constant 0 : i32
    %c0_i32_0 = arith.constant 0 : i32
    return %arg0, %c0_i32 : i32, i32
  }
}

</mosaic_0001>

<llo_original>
// kernel: tpu_custom_call.1
$region0: #{tpu_custom_call.1}
  #allocation0 [shape = 'u32[]', space=smem, size = 0x4, offset = 0x4, fixed_abs, tag = 'smem constant byte address 0x4 - core index']
  #allocation1 [shape = 'u32[144,128]{1,0:T(1,128)}', space=vmem, size = 0x12000, scoped, tag = 'internal scratch']
  %s0 = inlined_call_operand.hbm [shape: f32[1,512], index: 0, kind: input, shape index: {}]
  %s1 = inlined_call_operand.hbm [shape: f32[1,512], index: 1, kind: output, shape index: {}]
  %s2 = sld [smem:[#allocation0]]
  $region18: #{tpu_custom_call.1} parent=0
    _
  %s4 = ssub.s32 1, %s2
  %s5 = scalar_select 0, %s4, %s2
  $region1: #{tpu_custom_call.1} parent=0
    #allocation2 [shape = 'u8[2048]{0}', space=vmem, size = 0x800, scoped, tag = 'input window, operand 0, single buffered']
    #allocation3 [shape = 's32[1]{0}', space=sflag, size = 0x4, scoped, tag = 'scoped memory for tpu_custom_call.1']
    #allocation4 [shape = 's32[1]{0}', space=sflag, size = 0x4, scoped, tag = 'scoped memory for tpu_custom_call.1']
    #allocation5 [shape = 'u8[2048]{0}', space=vmem, size = 0x800, scoped, tag = 'output window, operand 0, single buffered']
    %6 = vsyncpa [#allocation3], 0
    %7 = vsyncpa [#allocation4], 0
    // Predicated region
    $region2: #{tpu_custom_call.1} parent=1 // pred_check
      _
    $region3: #{tpu_custom_call.1} parent=1 // pred_check_branch
      %9 = sbr.rel (0) target = $region5
    $region4: #{tpu_custom_call.1} parent=1 // pred_region
      %s11 = ssub.s32 64, 64
      %12 = vsyncadd [#allocation3], %s11
      %s14 = sshll.u32 [#allocation2], 4
      %s15 = int_to_ptr.vmem [resolvable:$true] %s14
      %17 = dma.hbm_to_vmem [thread:$0]  %s0, 64, %s15, [#allocation3]
    $region5: #{tpu_custom_call.1} parent=1 // pred_fallthru
      _
    // Predicated region
    $region6: #{tpu_custom_call.1} parent=1 // pred_check
      _
    $region7: #{tpu_custom_call.1} parent=1 // pred_check_branch
      %19 = sbr.rel (0) target = $region9
    $region8: #{tpu_custom_call.1} parent=1 // pred_region
      %20 = dma.done [#allocation3], 64
    $region9: #{tpu_custom_call.1} parent=1 // pred_fallthru
      _
    %v21 = vld [vmem:[#allocation2] sm:$0xf]
    %v22 = vmul.f32 %v21, 1.5957692
    %v23 = vmul.f32 %v21, %v21
    %v24 = vmul.f32 %v23, %v21
    %v25 = vmul.f32 %v24, 0.071354814
    %v26 = vadd.f32 %v22, %v25
    %v27 = vxor.u32 %v26, 2147483648
    %v28 = vmul.f32 %v27, 1.442695
    %v29 = vpow.pop %v28
    %v30 = vadd.f32 %v29, 1.0
    %v31 = vrcp.pop %v30
    %v32 = vmul.f32 1.0, %v31
    %v33 = vmul.f32 %v21, %v32
    %v34 = vlaneseq
    %vm35 = vcmp.ge.s32.totalorder %v34, 0
    %vm36 = vcmp.lt.s32.totalorder %v34, 512
    %vm37 = vmand %vm35, %vm36
    %38 = vst.msk [vmem:[#allocation5] sm:$0xf] %vm37, %v33
    // Predicated region
    $region10: #{tpu_custom_call.1} parent=1 // pred_check
      _
    $region11: #{tpu_custom_call.1} parent=1 // pred_check_branch
      %40 = sbr.rel (0) target = $region13
    $region12: #{tpu_custom_call.1} parent=1 // pred_region
      %s42 = ssub.s32 64, 64
      %43 = vsyncadd [#allocation4], %s42
      %s45 = sshll.u32 [#allocation5], 4
      %s46 = int_to_ptr.vmem [resolvable:$true] %s45
      %48 = dma.vmem_to_hbm [thread:$0]  %s46, 64, %s1, [#allocation4]
    $region13: #{tpu_custom_call.1} parent=1 // pred_fallthru
      _
    // Predicated region
    $region14: #{tpu_custom_call.1} parent=1 // pred_check
      _
    $region15: #{tpu_custom_call.1} parent=1 // pred_check_branch
      %50 = sbr.rel (0) target = $region17
    $region16: #{tpu_custom_call.1} parent=1 // pred_region
      %51 = dma.done [#allocation4], 64
    $region17: #{tpu_custom_call.1} parent=1 // pred_fallthru
      _
    %52 = vsyncpa [#allocation3], 1
    %53 = vsyncpa [#allocation4], 1

</llo_original>
